<compile_context>
chip_gen: v5e
topology: v5e:2x2
jax: 0.10.0
libtpu: 0.0.40
codegen_flags: <defaults>
</compile_context>

<pallas_src>
import functools

import jax
import jax.numpy as jnp
from jax import lax
from jax.experimental import pallas as pl
from jax.experimental.pallas import tpu as pltpu

GAMMA = 1e-10
LANES = 128              # vreg lane width; last dim of every tile
SUBLANES = 8             # sublane count of the f32 VMEM partial-sum accumulator
MAX_BLOCK_ROWS = 8192    # 8192 x 128 f32 = 4 MiB per input tile
VMEM_LIMIT_BYTES = 32 * 1024 * 1024  # explicit: v5e default scoped VMEM is 16 MiB


def _pick_chunk_rows(block_rows: int) -> int:
    """Largest nice sub-tile row count that divides block_rows (block_rows is
    always a multiple of 8, so this always returns >= 8)."""
    for c in (512, 256, 128, 64, 32, 16, 8):
        if block_rows % c == 0:
            return c
    return block_rows


def _bpr_loss_kernel(pos_ref, neg_ref, out_ref, acc_ref, *,
                     total_n, block_rows, chunk_rows, steps_per_core,
                     gamma, needs_mask, unroll):
    """Accumulates sum(-log(gamma + sigmoid(pos - neg))) over coarse row tiles.

    grid = (num_cores, steps_per_core): axis 0 is "parallel" (one slice per
    TensorCore on v7x), axis 1 is the serial reduction over row blocks.

    pos_ref / neg_ref : (block_rows, LANES) VMEM tiles of the score slabs
    out_ref           : (1, 1) SMEM per-core partial sum
    acc_ref           : (8, 128) VMEM f32 lane-parallel partial-sum accumulator
    """
    i = pl.program_id(1)

    @pl.when(i == 0)
    def _init():
        acc_ref[...] = jnp.zeros_like(acc_ref)

    n_chunks = block_rows // chunk_rows
    block_elems = block_rows * LANES
    # Global row-block index this step works on. Phantom blocks past the end
    # of the array were clamped in the index_map; their contribution is masked
    # to zero below.
    gb = pl.program_id(0) * steps_per_core + i

    def accumulate_tile(masked):
        """Fold this tile into acc_ref, chunk_rows rows at a time, so the f32
        intermediate stays in the vreg file instead of spilling to VMEM."""
        valid_in_block = total_n - gb * block_elems  # may be <= 0 (phantom)

        def body(ci, carry):
            r0 = ci * chunk_rows
            if not isinstance(r0, int):
                r0 = pl.multiple_of(r0, chunk_rows)
            pos = pos_ref[pl.ds(r0, chunk_rows), :].astype(jnp.float32)
            neg = neg_ref[pl.ds(r0, chunk_rows), :].astype(jnp.float32)
            # VPU sub + EUP (exp, recip, log). TODO: on v5e, if EUP ever binds,
            # switch sigmoid to pl.reciprocal(approx=True) form.
            contrib = -jnp.log(gamma + jax.nn.sigmoid(pos - neg))
            if masked:
                # Mask garbage / out-of-range lanes of a partial or phantom
                # trailing block. Local (in-block) indices -> int32-safe.
                row_ids = lax.broadcasted_iota(jnp.int32, (chunk_rows, LANES), 0)
                lane_ids = lax.broadcasted_iota(jnp.int32, (chunk_rows, LANES), 1)
                local_idx = (r0 + row_ids) * LANES + lane_ids
                contrib = jnp.where(local_idx < valid_in_block, contrib, 0.0)
            # Lane/sublane-parallel fold (chunk_rows,128)->(8,128): pure VPU adds.
            acc_ref[...] += contrib.reshape(
                chunk_rows // SUBLANES, SUBLANES, LANES).sum(axis=0)
            return carry

        lax.fori_loop(0, n_chunks, body, 0, unroll=unroll)

    if needs_mask:
        # Only trailing / phantom blocks pay for per-element masking; full
        # blocks take the mask-free hot path.
        full_blocks = total_n // block_elems
        is_full = gb < full_blocks

        @pl.when(is_full)
        def _full():
            accumulate_tile(masked=False)

        @pl.when(jnp.logical_not(is_full))
        def _partial():
            accumulate_tile(masked=True)
    else:
        accumulate_tile(masked=False)

    @pl.when(i == pl.num_programs(1) - 1)
    def _finalize():
        # Single cross-lane/sublane XLU reduce per core, once at the very end.
        out_ref[0, 0] = jnp.sum(acc_ref[...])


def bpr_loss(pos_score: jax.Array, neg_score: jax.Array, *,
             gamma: float = GAMMA,
             max_block_rows: int = MAX_BLOCK_ROWS,
             num_cores: int | None = None) -> jax.Array:
    """Pallas TPU implementation of BPRLoss.forward(pos_score, neg_score)."""
    assert pos_score.shape == neg_score.shape
    n = int(pos_score.size)
    assert n > 0
    # int32 index arithmetic inside the kernel / index maps.
    assert n < 2**31 - 2 * max_block_rows * LANES

    itemsize = jnp.dtype(pos_score.dtype).itemsize
    row_align = 16 if itemsize <= 2 else SUBLANES   # bf16/fp16 min tile is (16,128)

    rows = pl.cdiv(n, LANES)
    n128 = rows * LANES

    # Glue: flatten; pad ONLY to a lane multiple (copy happens only when
    # N % 128 != 0). The partial trailing block is masked in-kernel, never
    # padded to a whole block in HBM.
    pos_flat = pos_score.reshape(-1)
    neg_flat = neg_score.reshape(-1)
    if n128 != n:
        pos_flat = jnp.pad(pos_flat, (0, n128 - n))
        neg_flat = jnp.pad(neg_flat, (0, n128 - n))
    pos2d = pos_flat.reshape(rows, LANES)
    neg2d = neg_flat.reshape(rows, LANES)

    # Coarse row block: big for large N (amortize ~600-cycle per-step overhead),
    # collapsed to a single aligned block for small N.
    if rows >= max_block_rows:
        block_rows = max_block_rows
    else:
        block_rows = ((rows + row_align - 1) // row_align) * row_align
    block_elems = block_rows * LANES
    num_blocks = pl.cdiv(rows, block_rows)

    # v7x has 2 TensorCores/chip; split the reduction across them. 1 elsewhere.
    if num_cores is None:
        try:
            kind = jax.devices()[0].device_kind.lower()
        except Exception:
            kind = ""
        num_cores = 2 if ("v7" in kind or "7x" in kind) else 1
    num_cores = max(1, min(int(num_cores), num_blocks))

    steps_per_core = pl.cdiv(num_blocks, num_cores)
    covered = num_cores * steps_per_core * block_elems
    needs_mask = covered != n
    have_phantom = num_cores * steps_per_core != num_blocks

    if have_phantom:
        def in_map(c, i):
            # Phantom steps past the last real block re-read the last block;
            # their contribution is masked to zero inside the kernel.
            return (jnp.minimum(c * steps_per_core + i, num_blocks - 1), 0)
    else:
        def in_map(c, i):
            return (c * steps_per_core + i, 0)

    chunk_rows = _pick_chunk_rows(block_rows)
    n_chunks = block_rows // chunk_rows
    unroll = True if n_chunks <= 16 else 8

    kernel = functools.partial(
        _bpr_loss_kernel, total_n=n, block_rows=block_rows,
        chunk_rows=chunk_rows, steps_per_core=steps_per_core,
        gamma=gamma, needs_mask=needs_mask, unroll=unroll)

    partials = pl.pallas_call(
        kernel,
        out_shape=jax.ShapeDtypeStruct((num_cores, 1), jnp.float32),
        grid_spec=pltpu.PrefetchScalarGridSpec(
            num_scalar_prefetch=0,
            grid=(num_cores, steps_per_core),
            in_specs=[
                pl.BlockSpec((block_rows, LANES), in_map),
                pl.BlockSpec((block_rows, LANES), in_map),
            ],
            out_specs=pl.BlockSpec(
                (1, 1), lambda c, i: (c, 0),
                memory_space=pltpu.MemorySpace.SMEM),
            scratch_shapes=[pltpu.VMEM((SUBLANES, LANES), jnp.float32)],
        ),
        compiler_params=pltpu.CompilerParams(
            # axis 0: per-TensorCore slice; axis 1: serial reduction over blocks.
            dimension_semantics=("parallel", "arbitrary"),
            vmem_limit_bytes=VMEM_LIMIT_BYTES,
        ),
        cost_estimate=pl.CostEstimate(
            flops=6 * n,
            transcendentals=3 * n,
            bytes_accessed=2 * n * itemsize + 4 * num_cores,
        ),
    )(pos2d, neg2d)

    return jnp.sum(partials) / jnp.float32(n)


def _reference(pos_score, neg_score, gamma=GAMMA):
    return -jnp.mean(jnp.log(gamma + jax.nn.sigmoid(
        pos_score.astype(jnp.float32) - neg_score.astype(jnp.float32))))


if __name__ == "__main__":
    key = jax.random.PRNGKey(0)
    kp, kn = jax.random.split(key)

    # Lane-aligned shape: one (32, 128) block, single grid step, no masking.
    N = 4096
    pos = jax.random.normal(kp, (N,), dtype=jnp.float32)
    neg = jax.random.normal(kn, (N,), dtype=jnp.float32)
    loss = jax.block_until_ready(bpr_loss(pos, neg))
    ref = _reference(pos, neg)
    assert jnp.allclose(loss, ref, rtol=1e-5, atol=1e-6), (loss, ref)

    # Non-aligned shape: exercises lane padding + masked trailing block.
    N2 = 1000
    pos2 = jax.random.normal(kp, (N2,), dtype=jnp.float32)
    neg2 = jax.random.normal(kn, (N2,), dtype=jnp.float32)
    loss2 = jax.block_until_ready(bpr_loss(pos2, neg2))
    ref2 = _reference(pos2, neg2)
    assert jnp.allclose(loss2, ref2, rtol=1e-5, atol=1e-6), (loss2, ref2)

    # Multi-block + forced two-core split (v7x-style): small block size so the
    # phantom-block clamp + partial-block mask paths are exercised on any TPU.
    N3 = 40_000
    pos3 = jax.random.normal(kp, (N3,), dtype=jnp.float32)
    neg3 = jax.random.normal(kn, (N3,), dtype=jnp.float32)
    loss3 = jax.block_until_ready(
        bpr_loss(pos3, neg3, max_block_rows=64, num_cores=2))
    ref3 = _reference(pos3, neg3)
    assert jnp.allclose(loss3, ref3, rtol=1e-5, atol=1e-6), (loss3, ref3)

    print("KERNEL_OK")
</pallas_src>

<mosaic_0001>
module attributes {stable_mosaic.version = 11 : i64} {
  func.func @_bpr_loss_kernel(%arg0: i32, %arg1: i32, %arg2: memref<32x128xf32, #tpu.memory_space<vmem>>, %arg3: memref<32x128xf32, #tpu.memory_space<vmem>>, %arg4: memref<1x1xf32, #tpu.memory_space<smem>>, %arg5: memref<8x128xf32, #tpu.memory_space<vmem>>) attributes {dimension_semantics = [#tpu.dimension_semantics<parallel>, #tpu.dimension_semantics<arbitrary>], iteration_bounds = array<i64: 1, 1>, scalar_prefetch = 0 : i64, scratch_operands = 1 : i64, tpu.core_type = #tpu.core_type<tc>, window_params = [{transform_indices = @transform_0, window_bounds = array<i64: 32, 128>}, {transform_indices = @transform_1, window_bounds = array<i64: 32, 128>}, {transform_indices = @transform_2, window_bounds = array<i64: 1, 1>}]} {
    %c0_i32 = arith.constant 0 : i32
    %0 = arith.cmpi eq, %arg1, %c0_i32 : i32
    %1 = arith.extui %0 : i1 to i32
    %c0_i32_0 = arith.constant 0 : i32
    %2 = arith.cmpi ne, %1, %c0_i32_0 : i32
    scf.if %2 {
      %cst_12 = arith.constant 0.000000e+00 : f32
      %28 = vector.broadcast %cst_12 : f32 to vector<8x128xf32>
      %c0_13 = arith.constant 0 : index
      %c0_14 = arith.constant 0 : index
      %29 = vector.load %arg5[%c0_13, %c0_14] : memref<8x128xf32, #tpu.memory_space<vmem>>, vector<8x128xf32>
      tpu.vector_store %arg5[%c0_13, %c0_14], %28 {strides = array<i32>} : memref<8x128xf32, #tpu.memory_space<vmem>>, vector<8x128xf32>,
    } else {
    }
    %c0_i32_1 = arith.constant 0 : i32
    %c32_i32 = arith.constant 32 : i32
    %3 = arith.muli %c0_i32_1, %c32_i32 : i32
    %4 = tpu.assume_multiple %3, 32 : i32
    %5 = arith.index_cast %4 : i32 to index
    %c0 = arith.constant 0 : index
    %6 = vector.load %arg2[%5, %c0] : memref<32x128xf32, #tpu.memory_space<vmem>>, vector<32x128xf32>
    %7 = arith.index_cast %4 : i32 to index
    %c0_2 = arith.constant 0 : index
    %8 = vector.load %arg3[%7, %c0_2] : memref<32x128xf32, #tpu.memory_space<vmem>>, vector<32x128xf32>
    %9 = arith.subf %6, %8 : vector<32x128xf32>
    %10 = arith.negf %9 : vector<32x128xf32>
    %11 = math.exp %10 : vector<32x128xf32>
    %cst = arith.constant 1.000000e+00 : f32
    %12 = vector.broadcast %cst : f32 to vector<32x128xf32>
    %13 = arith.addf %12, %11 : vector<32x128xf32>
    %14 = arith.divf %12, %13 : vector<32x128xf32>
    %cst_3 = arith.constant 1.000000e-10 : f32
    %15 = vector.broadcast %cst_3 : f32 to vector<32x128xf32>
    %16 = arith.addf %15, %14 : vector<32x128xf32>
    %17 = math.log %16 : vector<32x128xf32>
    %cst_4 = arith.constant 0.000000e+00 : f32
    %18 = vector.broadcast %cst_4 : f32 to vector<32x128xf32>
    %19 = arith.subf %18, %17 : vector<32x128xf32>
    %c0_5 = arith.constant 0 : index
    %c0_6 = arith.constant 0 : index
    %20 = vector.load %arg5[%c0_5, %c0_6] : memref<8x128xf32, #tpu.memory_space<vmem>>, vector<8x128xf32>
    %21 = vector.shape_cast %19 : vector<32x128xf32> to vector<4x8x128xf32>
    %cst_7 = arith.constant dense<0.000000e+00> : vector<8x128xf32>
    %22 = vector.multi_reduction <add>, %21, %cst_7 [0] : vector<4x8x128xf32> to vector<8x128xf32>
    %23 = arith.addf %20, %22 : vector<8x128xf32>
    %c0_8 = arith.constant 0 : index
    %c0_9 = arith.constant 0 : index
    %24 = vector.load %arg5[%c0_8, %c0_9] : memref<8x128xf32, #tpu.memory_space<vmem>>, vector<8x128xf32>
    tpu.vector_store %arg5[%c0_8, %c0_9], %23 {strides = array<i32>} : memref<8x128xf32, #tpu.memory_space<vmem>>, vector<8x128xf32>,
    %c1_i32 = arith.constant 1 : i32
    %c0_i32_10 = arith.constant 0 : i32
    %25 = arith.cmpi eq, %arg1, %c0_i32_10 : i32
    %26 = arith.extui %25 : i1 to i32
    %c0_i32_11 = arith.constant 0 : i32
    %27 = arith.cmpi ne, %26, %c0_i32_11 : i32
    scf.if %27 {
      %c0_12 = arith.constant 0 : index
      %c0_13 = arith.constant 0 : index
      %28 = vector.load %arg5[%c0_12, %c0_13] : memref<8x128xf32, #tpu.memory_space<vmem>>, vector<8x128xf32>
      %29 = vector.shape_cast %28 : vector<8x128xf32> to vector<1x8x128xf32>
      %cst_14 = arith.constant dense<0.000000e+00> : vector<1xf32>
      %30 = vector.multi_reduction <add>, %29, %cst_14 [1, 2] : vector<1x8x128xf32> to vector<1xf32>
      %31 = vector.shape_cast %30 : vector<1xf32> to vector<1x1x1xf32>
      %32 = vector.extract %31[0, 0, 0] : f32 from vector<1x1x1xf32>
      %c0_15 = arith.constant 0 : index
      %c0_16 = arith.constant 0 : index
      %33 = memref.load %arg4[%c0_15, %c0_16] : memref<1x1xf32, #tpu.memory_space<smem>>
      memref.store %32, %arg4[%c0_15, %c0_16] : memref<1x1xf32, #tpu.memory_space<smem>>
    } else {
    }
    return
  }
  func.func @transform_0(%arg0: i32, %arg1: i32) -> (i32, i32) {
    %c1_i32 = arith.constant 1 : i32
    %0 = arith.muli %arg0, %c1_i32 : i32
    %1 = arith.addi %0, %arg1 : i32
    %c0_i32 = arith.constant 0 : i32
    %c0_i32_0 = arith.constant 0 : i32
    return %1, %c0_i32 : i32, i32
  }
  func.func @transform_1(%arg0: i32, %arg1: i32) -> (i32, i32) {
    %c1_i32 = arith.constant 1 : i32
    %0 = arith.muli %arg0, %c1_i32 : i32
    %1 = arith.addi %0, %arg1 : i32
    %c0_i32 = arith.constant 0 : i32
    %c0_i32_0 = arith.constant 0 : i32
    return %1, %c0_i32 : i32, i32
  }
  func.func @transform_2(%arg0: i32, %arg1: i32) -> (i32, i32) {
    %c0_i32 = arith.constant 0 : i32
    %c0_i32_0 = arith.constant 0 : i32
    return %arg0, %c0_i32 : i32, i32
  }
}

</mosaic_0001>

<llo_original>
// kernel: tpu_custom_call.1
$region0: #{tpu_custom_call.1}
  #allocation0 [shape = 'u32[]', space=smem, size = 0x4, offset = 0x4, fixed_abs, tag = 'smem constant byte address 0x4 - core index']
  #allocation1 [shape = 'u32[72,128]{1,0:T(1,128)}', space=vmem, size = 0x9000, scoped, tag = 'internal scratch']
  #allocation2 [shape = 'f32[8,128]{1,0:T(8,128)}', space=vmem, size = 0x1000, scoped, tag = 'scratch operand']
  %s0 = inlined_call_operand.hbm [shape: f32[32,128], index: 0, kind: input, shape index: {}]
  %s1 = inlined_call_operand.hbm [shape: f32[32,128], index: 1, kind: input, shape index: {}]
  %s2 = inlined_call_operand.hbm [shape: f32[1,1], index: 2, kind: output, shape index: {}]
  %s3 = sld [smem:[#allocation0]]
  $region34: #{tpu_custom_call.1} parent=0
    _
  %s5 = ssub.s32 1, %s3
  %s6 = scalar_select 0, %s5, %s3
  $region1: #{tpu_custom_call.1} parent=0
    #allocation3 [shape = 'u8[16384]{0}', space=vmem, size = 0x4000, scoped, tag = 'input window, operand 0, single buffered']
    #allocation4 [shape = 's32[1]{0}', space=sflag, size = 0x4, scoped, tag = 'scoped memory for tpu_custom_call.1']
    #allocation5 [shape = 's32[1]{0}', space=sflag, size = 0x4, scoped, tag = 'scoped memory for tpu_custom_call.1']
    #allocation6 [shape = 'u8[16384]{0}', space=vmem, size = 0x4000, scoped, tag = 'input window, operand 1, single buffered']
    #allocation7 [shape = 's32[1]{0}', space=sflag, size = 0x4, scoped, tag = 'scoped memory for tpu_custom_call.1']
    #allocation8 [shape = 'u8[512]{0}', space=smem, size = 0x200, scoped, tag = 'output window, operand 0, single buffered']
    %7 = vsyncpa [#allocation4], 0
    %8 = vsyncpa [#allocation7], 0
    %9 = vsyncpa [#allocation5], 0
    // Predicated region
    $region2: #{tpu_custom_call.1} parent=1 // pred_check
      _
    $region3: #{tpu_custom_call.1} parent=1 // pred_check_branch
      %11 = sbr.rel (0) target = $region5
    $region4: #{tpu_custom_call.1} parent=1 // pred_region
      %s12 = sadd.s32 0, 0
      %s13 = smul.u32 4, %s12
      %15 = vsyncadd [#allocation4], 0
      %s16 = smul.addr %s13, 8
      %s17 = scalar_lea.hbm %s0, %s16
      %s18 = sshll.u32 %s17, 4
      %s19 = int_to_ptr.hbm [resolvable:$true] %s18
      %s20 = sshll.u32 [#allocation3], 4
      %s21 = int_to_ptr.vmem [resolvable:$true] %s20
      %26 = dma.hbm_to_vmem [thread:$0]  %s19, 512, %s21, [#allocation4], 128, 128, 8
    $region5: #{tpu_custom_call.1} parent=1 // pred_fallthru
      _
    // Predicated region
    $region6: #{tpu_custom_call.1} parent=1 // pred_check
      _
    $region7: #{tpu_custom_call.1} parent=1 // pred_check_branch
      %28 = sbr.rel (0) target = $region9
    $region8: #{tpu_custom_call.1} parent=1 // pred_region
      %s29 = sadd.s32 0, 0
      %s30 = smul.u32 4, %s29
      %32 = vsyncadd [#allocation7], 0
      %s33 = smul.addr %s30, 8
      %s34 = scalar_lea.hbm %s1, %s33
      %s35 = sshll.u32 %s34, 4
      %s36 = int_to_ptr.hbm [resolvable:$true] %s35
      %s37 = sshll.u32 [#allocation6], 4
      %s38 = int_to_ptr.vmem [resolvable:$true] %s37
      %43 = dma.hbm_to_vmem [thread:$0]  %s36, 512, %s38, [#allocation7], 128, 128, 8
    $region9: #{tpu_custom_call.1} parent=1 // pred_fallthru
      _
    // Predicated region
    $region10: #{tpu_custom_call.1} parent=1 // pred_check
      _
    $region11: #{tpu_custom_call.1} parent=1 // pred_check_branch
      %45 = sbr.rel (0) target = $region13
    $region12: #{tpu_custom_call.1} parent=1 // pred_region
      %47 = dma.done [#allocation4], 512
    $region13: #{tpu_custom_call.1} parent=1 // pred_fallthru
      _
    // Predicated region
    $region14: #{tpu_custom_call.1} parent=1 // pred_check
      _
    $region15: #{tpu_custom_call.1} parent=1 // pred_check_branch
      %49 = sbr.rel (0) target = $region17
    $region16: #{tpu_custom_call.1} parent=1 // pred_region
      %51 = dma.done [#allocation7], 512
    $region17: #{tpu_custom_call.1} parent=1 // pred_fallthru
      _
    %s52 = sadd.s32 0, 0
    %s53 = smul.u32 4, %s52
    %s54 = sadd.s32 0, 0
    %s55 = smul.u32 4, %s54
    %p56 = scmp.eq.s32.totalorder 0, 0
    // Predicated region
    $region18: #{tpu_custom_call.1} parent=1 // pred_check
      %p57 = pneg %p56
    $region19: #{tpu_custom_call.1} parent=1 // pred_check_branch
      %59 = sbr.rel (%p57) target = $region21
    $region20: #{tpu_custom_call.1} parent=1 // pred_region
      %60 = vst [vmem:[#allocation2] sm:$0xff] 0.0
    $region21: #{tpu_custom_call.1} parent=1 // pred_fallthru
      _
    %v61 = vld [vmem:[#allocation3] sm:$0xff]
    %v62 = vld [vmem:[#allocation3 + $0x8] sm:$0xff]
    %v63 = vld [vmem:[#allocation3 + $0x10] sm:$0xff]
    %v64 = vld [vmem:[#allocation3 + $0x18] sm:$0xff]
    %v65 = vld [vmem:[#allocation6] sm:$0xff]
    %v66 = vld [vmem:[#allocation6 + $0x8] sm:$0xff]
    %v67 = vld [vmem:[#allocation6 + $0x10] sm:$0xff]
    %v68 = vld [vmem:[#allocation6 + $0x18] sm:$0xff]
    %v69 = vsub.f32 %v61, %v65
    %v70 = vsub.f32 %v62, %v66
    %v71 = vsub.f32 %v63, %v67
    %v72 = vsub.f32 %v64, %v68
    %v73 = vxor.u32 %v69, 2147483648
    %v74 = vxor.u32 %v70, 2147483648
    %v75 = vxor.u32 %v71, 2147483648
    %v76 = vxor.u32 %v72, 2147483648
    %v77 = vmul.f32 %v73, 1.442695
    %v78 = vpow.pop %v77
    %v79 = vmul.f32 %v74, 1.442695
    %v80 = vpow.pop %v79
    %v81 = vmul.f32 %v75, 1.442695
    %v82 = vpow.pop %v81
    %v83 = vmul.f32 %v76, 1.442695
    %v84 = vpow.pop %v83
    %v85 = vadd.f32 %v78, 1.0
    %v86 = vadd.f32 %v80, 1.0
    %v87 = vadd.f32 %v82, 1.0
    %v88 = vadd.f32 %v84, 1.0
    %v89 = vrcp.pop %v85
    %v90 = vmul.f32 %v85, %v89
    %v91 = vsub.f32 1.0, %v90
    %v92 = vmul.f32 %v89, %v91
    %v93 = vadd.f32 %v89, %v92
    %vm94 = vweird.f32 %v85
    %vm95 = vweird.f32 %v89
    %vm96 = vmor %vm94, %vm95
    %v97 = vsel %vm96, %v89, %v93
    %v98 = vand.u32 2147483647, %v85
    %vm99 = vcmp.eq.f32.partialorder %v98, 8.507059e+37
    %v100 = vand.u32 %v85, 2147483648
    %v101 = vor.u32 1.1754944e-38, %v100
    %v102 = vsel %vm99, %v101, %v97
    %v103 = vmul.f32 1.0, %v102
    %v104 = vrcp.pop %v86
    %v105 = vmul.f32 %v86, %v104
    %v106 = vsub.f32 1.0, %v105
    %v107 = vmul.f32 %v104, %v106
    %v108 = vadd.f32 %v104, %v107
    %vm109 = vweird.f32 %v86
    %vm110 = vweird.f32 %v104
    %vm111 = vmor %vm109, %vm110
    %v112 = vsel %vm111, %v104, %v108
    %v113 = vand.u32 2147483647, %v86
    %vm114 = vcmp.eq.f32.partialorder %v113, 8.507059e+37
    %v115 = vand.u32 %v86, 2147483648
    %v116 = vor.u32 1.1754944e-38, %v115
    %v117 = vsel %vm114, %v116, %v112
    %v118 = vmul.f32 1.0, %v117
    %v119 = vrcp.pop %v87
    %v120 = vmul.f32 %v87, %v119
    %v121 = vsub.f32 1.0, %v120
    %v122 = vmul.f32 %v119, %v121
    %v123 = vadd.f32 %v119, %v122
    %vm124 = vweird.f32 %v87
    %vm125 = vweird.f32 %v119
    %vm126 = vmor %vm124, %vm125
    %v127 = vsel %vm126, %v119, %v123
    %v128 = vand.u32 2147483647, %v87
    %vm129 = vcmp.eq.f32.partialorder %v128, 8.507059e+37
    %v130 = vand.u32 %v87, 2147483648
    %v131 = vor.u32 1.1754944e-38, %v130
    %v132 = vsel %vm129, %v131, %v127
    %v133 = vmul.f32 1.0, %v132
    %v134 = vrcp.pop %v88
    %v135 = vmul.f32 %v88, %v134
    %v136 = vsub.f32 1.0, %v135
    %v137 = vmul.f32 %v134, %v136
    %v138 = vadd.f32 %v134, %v137
    %vm139 = vweird.f32 %v88
    %vm140 = vweird.f32 %v134
    %vm141 = vmor %vm139, %vm140
    %v142 = vsel %vm141, %v134, %v138
    %v143 = vand.u32 2147483647, %v88
    %vm144 = vcmp.eq.f32.partialorder %v143, 8.507059e+37
    %v145 = vand.u32 %v88, 2147483648
    %v146 = vor.u32 1.1754944e-38, %v145
    %v147 = vsel %vm144, %v146, %v142
    %v148 = vmul.f32 1.0, %v147
    %v149 = vadd.f32 %v103, 1e-10
    %v150 = vadd.f32 %v118, 1e-10
    %v151 = vadd.f32 %v133, 1e-10
    %v152 = vadd.f32 %v148, 1e-10
    %v153 = vlog2.pop %v149
    %v154 = vmul.f32 %v153, 0.6931472
    %v155 = vlog2.pop %v150
    %v156 = vmul.f32 %v155, 0.6931472
    %v157 = vlog2.pop %v151
    %v158 = vmul.f32 %v157, 0.6931472
    %v159 = vlog2.pop %v152
    %v160 = vmul.f32 %v159, 0.6931472
    %v161 = vsub.f32 0.0, %v154
    %v162 = vsub.f32 0.0, %v156
    %v163 = vsub.f32 0.0, %v158
    %v164 = vsub.f32 0.0, %v160
    %v165 = vld [vmem:[#allocation2] sm:$0xff]
    %v166 = vadd.f32 %v161, %v162
    %v167 = vadd.f32 %v166, %v163
    %v168 = vadd.f32 %v167, %v164
    %v169 = vadd.f32 %v165, %v168
    %170 = vst [vmem:[#allocation2] sm:$0xff] %v169
    // Predicated region
    $region22: #{tpu_custom_call.1} parent=1 // pred_check
      %p171 = pneg %p56
    $region23: #{tpu_custom_call.1} parent=1 // pred_check_branch
      %173 = sbr.rel (%p171) target = $region25
    $region24: #{tpu_custom_call.1} parent=1 // pred_region
      %v174 = vld [vmem:[#allocation2] sm:$0xff]
      %175 = vadd.xlane.f32.xlu0 %v174
      %v176 = vpop.xlane.xlu0 %175
      %v177 = vrot.slane %v176, 4
      %v178 = vadd.f32 %v176, %v177
      %v179 = vrot.slane %v178, 2
      %v180 = vadd.f32 %v178, %v179
      %v181 = vrot.slane %v180, 1
      %v182 = vadd.f32 %v180, %v181
      %s183 = vtos %v182
      %s184 = scalar_lea.smem [#allocation8], 0
      %185 = sst [smem:[%s184]] %s183
    $region25: #{tpu_custom_call.1} parent=1 // pred_fallthru
      _
    // Predicated region
    $region26: #{tpu_custom_call.1} parent=1 // pred_check
      _
    $region27: #{tpu_custom_call.1} parent=1 // pred_check_branch
      %187 = sbr.rel (0) target = $region29
    $region28: #{tpu_custom_call.1} parent=1 // pred_region
      %189 = vsyncadd [#allocation5], 0
      %s191 = sshll.u32 %s2, 4
      %s192 = int_to_ptr.hbm [resolvable:$true] %s191
      %194 = dma.smem_to_hbm [#allocation8], 16, %s192, [#allocation5]
    $region29: #{tpu_custom_call.1} parent=1 // pred_fallthru
      _
    // Predicated region
    $region30: #{tpu_custom_call.1} parent=1 // pred_check
      _
    $region31: #{tpu_custom_call.1} parent=1 // pred_check_branch
      %196 = sbr.rel (0) target = $region33
    $region32: #{tpu_custom_call.1} parent=1 // pred_region
      %198 = dma.done [#allocation5], 16
    $region33: #{tpu_custom_call.1} parent=1 // pred_fallthru
      _
    %199 = sfence
    %200 = vsyncpa [#allocation4], 1
    %201 = vsyncpa [#allocation7], 1
    %202 = vsyncpa [#allocation5], 1

</llo_original>
